<compile_context>
chip_gen: v7x
topology: tpu7x:2x2x1
jax: 0.10.0
libtpu: 0.0.40
codegen_flags: <defaults>
</compile_context>

<pallas_src>
import jax
import jax.numpy as jnp
from jax import lax
from jax.experimental import pallas as pl
from jax.experimental.pallas import tpu as pltpu

# ---- "settings" (synthetic, small) -----------------------------------------
NUM_CHORDS = 24          # settings.num_chords
EMBED_DIM = 16           # settings.chord_embedding_dim
HIDDEN = 32              # settings.chord_lstm_hidden_layer_size
SEQ_LEN = 8              # len(chord_sequence)


def chord_lstm_kernel(seq_ref, fused_tbl_ref, w_hh_t_ref, w_out_t_ref,
                      b_out_ref, out_ref):
    """Fused forward pass.

    seq_ref       (T, 1)  int32  chord ids (VMEM)
    fused_tbl_ref (C, 4H) f32    embedding @ W_ih^T + b_ih + b_hh (VMEM)
    w_hh_t_ref    (H, 4H) f32    hidden->gates weight, pre-transposed
    w_out_t_ref   (H, C)  f32    hidden->chord weight, pre-transposed
    b_out_ref     (1, C)  f32    output bias
    out_ref       (T, C)  f32    log-probabilities
    """
    T = out_ref.shape[0]
    C = fused_tbl_ref.shape[0]
    Hd = w_hh_t_ref.shape[0]

    # ---- gather + input projection + gate bias as ONE one-hot MXU matmul ----
    # xg[t] = fused_tbl[seq[t]] = embedding[seq[t]] @ W_ih^T + b_ih + b_hh
    col = lax.broadcasted_iota(jnp.int32, (T, C), 1)                  # (T, C)
    one_hot = (col == seq_ref[...]).astype(jnp.float32)               # (T, C)
    xg = jnp.dot(one_hot, fused_tbl_ref[...],
                 preferred_element_type=jnp.float32)                  # (T, 4H)

    # ---- LSTM recurrence, fully unrolled; all state lives in vregs ----
    w_hh = w_hh_t_ref[...]                                            # loaded once
    h = jnp.zeros((1, Hd), jnp.float32)
    c = jnp.zeros((1, Hd), jnp.float32)
    hs = []
    for t in range(T):
        gates = xg[t:t + 1, :] + jnp.dot(
            h, w_hh, preferred_element_type=jnp.float32)              # (1, 4H)
        # 2 EUP pushes per step (full-width), gate selection via lane slices.
        s = jax.nn.sigmoid(gates)                                     # (1, 4H)
        u = jnp.tanh(gates)                                           # (1, 4H)
        i_g = s[:, 0:Hd]
        f_g = s[:, Hd:2 * Hd]
        g_g = u[:, 2 * Hd:3 * Hd]
        o_g = s[:, 3 * Hd:4 * Hd]
        c = f_g * c + i_g * g_g
        h = o_g * jnp.tanh(c)
        hs.append(h)
    hidden = jnp.concatenate(hs, axis=0)                              # (T, H)

    # ---- hidden -> chord space, then log_softmax over chords (axis=1) ----
    logits = (jnp.dot(hidden, w_out_t_ref[...],
                      preferred_element_type=jnp.float32)
              + b_out_ref[...])                                       # (T, C)
    m = jnp.max(logits, axis=1, keepdims=True)
    shifted = logits - m
    lse = jnp.log(jnp.sum(jnp.exp(shifted), axis=1, keepdims=True))
    out_ref[...] = shifted - lse


def make_params(key):
    """PyTorch-style init; embedding/input-proj/bias pre-fused into one table."""
    ks = jax.random.split(key, 7)
    bound = 1.0 / jnp.sqrt(jnp.float32(HIDDEN))
    embedding = jax.random.normal(ks[0], (NUM_CHORDS, EMBED_DIM), jnp.float32)
    w_ih = jax.random.uniform(ks[1], (4 * HIDDEN, EMBED_DIM), jnp.float32, -bound, bound)
    w_hh = jax.random.uniform(ks[2], (4 * HIDDEN, HIDDEN), jnp.float32, -bound, bound)
    b_ih = jax.random.uniform(ks[3], (4 * HIDDEN,), jnp.float32, -bound, bound)
    b_hh = jax.random.uniform(ks[4], (4 * HIDDEN,), jnp.float32, -bound, bound)
    w_out = jax.random.uniform(ks[5], (NUM_CHORDS, HIDDEN), jnp.float32, -bound, bound)
    b_out = jax.random.uniform(ks[6], (NUM_CHORDS,), jnp.float32, -bound, bound)

    w_ih_t = jnp.asarray(w_ih.T)                          # (E, 4H)
    b_gates = (b_ih + b_hh).reshape(1, -1)                # (1, 4H)
    return {
        # fused per-chord table: embedding @ W_ih^T + (b_ih + b_hh)  -> (C, 4H)
        "fused_tbl": embedding @ w_ih_t + b_gates,
        "w_hh_t": jnp.asarray(w_hh.T),                    # (H, 4H)
        "w_out_t": jnp.asarray(w_out.T),                  # (H, C)
        "b_out": b_out.reshape(1, -1),                    # (1, C)
        # raw components kept only for the pure-JAX reference check:
        "embedding": embedding,
        "w_ih_t": w_ih_t,
        "b_gates": b_gates,
    }


@jax.jit
def chord_lstm_forward(chord_sequence, params):
    """chord_sequence: (T,) int chord ids. Returns (T, NUM_CHORDS) log-probs."""
    T = chord_sequence.shape[0]
    # Clamp ids (correctness review): the one-hot gather is OOB-safe anyway,
    # but clamping preserves "some valid row" semantics for bad ids.
    seq = jnp.clip(chord_sequence.astype(jnp.int32), 0, NUM_CHORDS - 1).reshape(T, 1)
    vmem = pl.BlockSpec(memory_space=pltpu.MemorySpace.VMEM)
    return pl.pallas_call(
        chord_lstm_kernel,
        out_shape=jax.ShapeDtypeStruct((T, NUM_CHORDS), jnp.float32),
        in_specs=[vmem] * 5,
        out_specs=vmem,
    )(seq, params["fused_tbl"], params["w_hh_t"], params["w_out_t"],
      params["b_out"])


def chord_lstm_reference(chord_sequence, params):
    """Pure-JAX reference of the same forward pass (un-fused math)."""
    emb = params["embedding"][chord_sequence]                        # (T, E)

    def step(carry, x):
        h, c = carry
        gates = (x[None, :] @ params["w_ih_t"] + h @ params["w_hh_t"]
                 + params["b_gates"])
        i_g, f_g, g_g, o_g = jnp.split(gates, 4, axis=1)
        i_g = jax.nn.sigmoid(i_g)
        f_g = jax.nn.sigmoid(f_g)
        g_g = jnp.tanh(g_g)
        o_g = jax.nn.sigmoid(o_g)
        c = f_g * c + i_g * g_g
        h = o_g * jnp.tanh(c)
        return (h, c), h[0]

    h0 = jnp.zeros((1, HIDDEN), jnp.float32)
    c0 = jnp.zeros((1, HIDDEN), jnp.float32)
    _, hs = lax.scan(step, (h0, c0), emb)                            # (T, H)
    logits = hs @ params["w_out_t"] + params["b_out"]                # (T, C)
    return jax.nn.log_softmax(logits, axis=1)


if __name__ == "__main__":
    key = jax.random.PRNGKey(0)
    k_seq, k_params = jax.random.split(key)

    chord_sequence = jax.random.randint(k_seq, (SEQ_LEN,), 0, NUM_CHORDS, dtype=jnp.int32)
    params = make_params(k_params)

    log_probs = chord_lstm_forward(chord_sequence, params)
    jax.block_until_ready(log_probs)

    assert log_probs.shape == (SEQ_LEN, NUM_CHORDS)
    # rows of log_softmax must (exp-)sum to 1
    row_sums = jnp.exp(log_probs).sum(axis=1)
    assert bool(jnp.all(jnp.abs(row_sums - 1.0) < 1e-4))
    # match pure-JAX reference (loose tol: f32 MXU vs XLA matmul rounding)
    ref = chord_lstm_reference(chord_sequence, params)
    assert bool(jnp.all(jnp.abs(log_probs - ref) < 1e-2))

    print("KERNEL_OK")
</pallas_src>

<mosaic_0001>
module attributes {stable_mosaic.version = 11 : i64} {
  func.func @chord_lstm_kernel(%arg0: memref<8x1xi32, #tpu.memory_space<vmem>>, %arg1: memref<24x128xf32, #tpu.memory_space<vmem>>, %arg2: memref<32x128xf32, #tpu.memory_space<vmem>>, %arg3: memref<32x24xf32, #tpu.memory_space<vmem>>, %arg4: memref<1x24xf32, #tpu.memory_space<vmem>>, %arg5: memref<8x24xf32, #tpu.memory_space<vmem>>) attributes {dimension_semantics = [], scalar_prefetch = 0 : i64, scratch_operands = 0 : i64, tpu.core_type = #tpu.core_type<tc>} {
    %0 = tpu.iota {dimensions = array<i32: 1>} : vector<8x24xi32>
    %c0 = arith.constant 0 : index
    %c0_0 = arith.constant 0 : index
    %1 = vector.load %arg0[%c0, %c0_0] : memref<8x1xi32, #tpu.memory_space<vmem>>, vector<8x1xi32>
    %2 = vector.broadcast %1 : vector<8x1xi32> to vector<8x24xi32>
    %3 = arith.cmpi eq, %0, %2 : vector<8x24xi32>
    %4 = arith.extui %3 : vector<8x24xi1> to vector<8x24xi32>
    %5 = arith.sitofp %4 : vector<8x24xi32> to vector<8x24xf32>
    %c0_1 = arith.constant 0 : index
    %c0_2 = arith.constant 0 : index
    %6 = vector.load %arg1[%c0_1, %c0_2] : memref<24x128xf32, #tpu.memory_space<vmem>>, vector<24x128xf32>
    %cst = arith.constant dense<0.000000e+00> : vector<8x128xf32>
    %7 = tpu.matmul %5, %6, %cst {dimension_numbers = #tpu.dot_dimension_numbers<[1], [0], [0], [1], [0, 0, 1, 1], [], []>} : vector<8x24xf32>, vector<24x128xf32>, vector<8x128xf32> -> vector<8x128xf32>
    %c0_3 = arith.constant 0 : index
    %c0_4 = arith.constant 0 : index
    %8 = vector.load %arg2[%c0_3, %c0_4] : memref<32x128xf32, #tpu.memory_space<vmem>>, vector<32x128xf32>
    %cst_5 = arith.constant 0.000000e+00 : f32
    %9 = vector.broadcast %cst_5 : f32 to vector<1x32xf32>
    %cst_6 = arith.constant 0.000000e+00 : f32
    %10 = vector.broadcast %cst_6 : f32 to vector<1x32xf32>
    %11 = vector.extract_strided_slice %7 {offsets = [0, 0], sizes = [1, 128], strides = [1, 1]} : vector<8x128xf32> to vector<1x128xf32>
    %cst_7 = arith.constant dense<0.000000e+00> : vector<1x128xf32>
    %12 = tpu.matmul %9, %8, %cst_7 {dimension_numbers = #tpu.dot_dimension_numbers<[1], [0], [0], [1], [0, 0, 1, 1], [], []>} : vector<1x32xf32>, vector<32x128xf32>, vector<1x128xf32> -> vector<1x128xf32>
    %13 = arith.addf %11, %12 : vector<1x128xf32>
    %14 = arith.negf %13 : vector<1x128xf32>
    %15 = math.exp %14 : vector<1x128xf32>
    %cst_8 = arith.constant 1.000000e+00 : f32
    %16 = vector.broadcast %cst_8 : f32 to vector<1x128xf32>
    %17 = arith.addf %16, %15 : vector<1x128xf32>
    %18 = arith.divf %16, %17 : vector<1x128xf32>
    %19 = math.tanh %13 : vector<1x128xf32>
    %20 = vector.extract_strided_slice %18 {offsets = [0, 0], sizes = [1, 32], strides = [1, 1]} : vector<1x128xf32> to vector<1x32xf32>
    %21 = vector.extract_strided_slice %18 {offsets = [0, 32], sizes = [1, 32], strides = [1, 1]} : vector<1x128xf32> to vector<1x32xf32>
    %22 = vector.extract_strided_slice %19 {offsets = [0, 64], sizes = [1, 32], strides = [1, 1]} : vector<1x128xf32> to vector<1x32xf32>
    %23 = vector.extract_strided_slice %18 {offsets = [0, 96], sizes = [1, 32], strides = [1, 1]} : vector<1x128xf32> to vector<1x32xf32>
    %24 = arith.mulf %21, %10 : vector<1x32xf32>
    %25 = arith.mulf %20, %22 : vector<1x32xf32>
    %26 = arith.addf %24, %25 : vector<1x32xf32>
    %27 = math.tanh %26 : vector<1x32xf32>
    %28 = arith.mulf %23, %27 : vector<1x32xf32>
    %29 = vector.extract_strided_slice %7 {offsets = [1, 0], sizes = [1, 128], strides = [1, 1]} : vector<8x128xf32> to vector<1x128xf32>
    %cst_9 = arith.constant dense<0.000000e+00> : vector<1x128xf32>
    %30 = tpu.matmul %28, %8, %cst_9 {dimension_numbers = #tpu.dot_dimension_numbers<[1], [0], [0], [1], [0, 0, 1, 1], [], []>} : vector<1x32xf32>, vector<32x128xf32>, vector<1x128xf32> -> vector<1x128xf32>
    %31 = arith.addf %29, %30 : vector<1x128xf32>
    %32 = arith.negf %31 : vector<1x128xf32>
    %33 = math.exp %32 : vector<1x128xf32>
    %cst_10 = arith.constant 1.000000e+00 : f32
    %34 = vector.broadcast %cst_10 : f32 to vector<1x128xf32>
    %35 = arith.addf %34, %33 : vector<1x128xf32>
    %36 = arith.divf %34, %35 : vector<1x128xf32>
    %37 = math.tanh %31 : vector<1x128xf32>
    %38 = vector.extract_strided_slice %36 {offsets = [0, 0], sizes = [1, 32], strides = [1, 1]} : vector<1x128xf32> to vector<1x32xf32>
    %39 = vector.extract_strided_slice %36 {offsets = [0, 32], sizes = [1, 32], strides = [1, 1]} : vector<1x128xf32> to vector<1x32xf32>
    %40 = vector.extract_strided_slice %37 {offsets = [0, 64], sizes = [1, 32], strides = [1, 1]} : vector<1x128xf32> to vector<1x32xf32>
    %41 = vector.extract_strided_slice %36 {offsets = [0, 96], sizes = [1, 32], strides = [1, 1]} : vector<1x128xf32> to vector<1x32xf32>
    %42 = arith.mulf %39, %26 : vector<1x32xf32>
    %43 = arith.mulf %38, %40 : vector<1x32xf32>
    %44 = arith.addf %42, %43 : vector<1x32xf32>
    %45 = math.tanh %44 : vector<1x32xf32>
    %46 = arith.mulf %41, %45 : vector<1x32xf32>
    %47 = vector.extract_strided_slice %7 {offsets = [2, 0], sizes = [1, 128], strides = [1, 1]} : vector<8x128xf32> to vector<1x128xf32>
    %cst_11 = arith.constant dense<0.000000e+00> : vector<1x128xf32>
    %48 = tpu.matmul %46, %8, %cst_11 {dimension_numbers = #tpu.dot_dimension_numbers<[1], [0], [0], [1], [0, 0, 1, 1], [], []>} : vector<1x32xf32>, vector<32x128xf32>, vector<1x128xf32> -> vector<1x128xf32>
    %49 = arith.addf %47, %48 : vector<1x128xf32>
    %50 = arith.negf %49 : vector<1x128xf32>
    %51 = math.exp %50 : vector<1x128xf32>
    %cst_12 = arith.constant 1.000000e+00 : f32
    %52 = vector.broadcast %cst_12 : f32 to vector<1x128xf32>
    %53 = arith.addf %52, %51 : vector<1x128xf32>
    %54 = arith.divf %52, %53 : vector<1x128xf32>
    %55 = math.tanh %49 : vector<1x128xf32>
    %56 = vector.extract_strided_slice %54 {offsets = [0, 0], sizes = [1, 32], strides = [1, 1]} : vector<1x128xf32> to vector<1x32xf32>
    %57 = vector.extract_strided_slice %54 {offsets = [0, 32], sizes = [1, 32], strides = [1, 1]} : vector<1x128xf32> to vector<1x32xf32>
    %58 = vector.extract_strided_slice %55 {offsets = [0, 64], sizes = [1, 32], strides = [1, 1]} : vector<1x128xf32> to vector<1x32xf32>
    %59 = vector.extract_strided_slice %54 {offsets = [0, 96], sizes = [1, 32], strides = [1, 1]} : vector<1x128xf32> to vector<1x32xf32>
    %60 = arith.mulf %57, %44 : vector<1x32xf32>
    %61 = arith.mulf %56, %58 : vector<1x32xf32>
    %62 = arith.addf %60, %61 : vector<1x32xf32>
    %63 = math.tanh %62 : vector<1x32xf32>
    %64 = arith.mulf %59, %63 : vector<1x32xf32>
    %65 = vector.extract_strided_slice %7 {offsets = [3, 0], sizes = [1, 128], strides = [1, 1]} : vector<8x128xf32> to vector<1x128xf32>
    %cst_13 = arith.constant dense<0.000000e+00> : vector<1x128xf32>
    %66 = tpu.matmul %64, %8, %cst_13 {dimension_numbers = #tpu.dot_dimension_numbers<[1], [0], [0], [1], [0, 0, 1, 1], [], []>} : vector<1x32xf32>, vector<32x128xf32>, vector<1x128xf32> -> vector<1x128xf32>
    %67 = arith.addf %65, %66 : vector<1x128xf32>
    %68 = arith.negf %67 : vector<1x128xf32>
    %69 = math.exp %68 : vector<1x128xf32>
    %cst_14 = arith.constant 1.000000e+00 : f32
    %70 = vector.broadcast %cst_14 : f32 to vector<1x128xf32>
    %71 = arith.addf %70, %69 : vector<1x128xf32>
    %72 = arith.divf %70, %71 : vector<1x128xf32>
    %73 = math.tanh %67 : vector<1x128xf32>
    %74 = vector.extract_strided_slice %72 {offsets = [0, 0], sizes = [1, 32], strides = [1, 1]} : vector<1x128xf32> to vector<1x32xf32>
    %75 = vector.extract_strided_slice %72 {offsets = [0, 32], sizes = [1, 32], strides = [1, 1]} : vector<1x128xf32> to vector<1x32xf32>
    %76 = vector.extract_strided_slice %73 {offsets = [0, 64], sizes = [1, 32], strides = [1, 1]} : vector<1x128xf32> to vector<1x32xf32>
    %77 = vector.extract_strided_slice %72 {offsets = [0, 96], sizes = [1, 32], strides = [1, 1]} : vector<1x128xf32> to vector<1x32xf32>
    %78 = arith.mulf %75, %62 : vector<1x32xf32>
    %79 = arith.mulf %74, %76 : vector<1x32xf32>
    %80 = arith.addf %78, %79 : vector<1x32xf32>
    %81 = math.tanh %80 : vector<1x32xf32>
    %82 = arith.mulf %77, %81 : vector<1x32xf32>
    %83 = vector.extract_strided_slice %7 {offsets = [4, 0], sizes = [1, 128], strides = [1, 1]} : vector<8x128xf32> to vector<1x128xf32>
    %cst_15 = arith.constant dense<0.000000e+00> : vector<1x128xf32>
    %84 = tpu.matmul %82, %8, %cst_15 {dimension_numbers = #tpu.dot_dimension_numbers<[1], [0], [0], [1], [0, 0, 1, 1], [], []>} : vector<1x32xf32>, vector<32x128xf32>, vector<1x128xf32> -> vector<1x128xf32>
    %85 = arith.addf %83, %84 : vector<1x128xf32>
    %86 = arith.negf %85 : vector<1x128xf32>
    %87 = math.exp %86 : vector<1x128xf32>
    %cst_16 = arith.constant 1.000000e+00 : f32
    %88 = vector.broadcast %cst_16 : f32 to vector<1x128xf32>
    %89 = arith.addf %88, %87 : vector<1x128xf32>
    %90 = arith.divf %88, %89 : vector<1x128xf32>
    %91 = math.tanh %85 : vector<1x128xf32>
    %92 = vector.extract_strided_slice %90 {offsets = [0, 0], sizes = [1, 32], strides = [1, 1]} : vector<1x128xf32> to vector<1x32xf32>
    %93 = vector.extract_strided_slice %90 {offsets = [0, 32], sizes = [1, 32], strides = [1, 1]} : vector<1x128xf32> to vector<1x32xf32>
    %94 = vector.extract_strided_slice %91 {offsets = [0, 64], sizes = [1, 32], strides = [1, 1]} : vector<1x128xf32> to vector<1x32xf32>
    %95 = vector.extract_strided_slice %90 {offsets = [0, 96], sizes = [1, 32], strides = [1, 1]} : vector<1x128xf32> to vector<1x32xf32>
    %96 = arith.mulf %93, %80 : vector<1x32xf32>
    %97 = arith.mulf %92, %94 : vector<1x32xf32>
    %98 = arith.addf %96, %97 : vector<1x32xf32>
    %99 = math.tanh %98 : vector<1x32xf32>
    %100 = arith.mulf %95, %99 : vector<1x32xf32>
    %101 = vector.extract_strided_slice %7 {offsets = [5, 0], sizes = [1, 128], strides = [1, 1]} : vector<8x128xf32> to vector<1x128xf32>
    %cst_17 = arith.constant dense<0.000000e+00> : vector<1x128xf32>
    %102 = tpu.matmul %100, %8, %cst_17 {dimension_numbers = #tpu.dot_dimension_numbers<[1], [0], [0], [1], [0, 0, 1, 1], [], []>} : vector<1x32xf32>, vector<32x128xf32>, vector<1x128xf32> -> vector<1x128xf32>
    %103 = arith.addf %101, %102 : vector<1x128xf32>
    %104 = arith.negf %103 : vector<1x128xf32>
    %105 = math.exp %104 : vector<1x128xf32>
    %cst_18 = arith.constant 1.000000e+00 : f32
    %106 = vector.broadcast %cst_18 : f32 to vector<1x128xf32>
    %107 = arith.addf %106, %105 : vector<1x128xf32>
    %108 = arith.divf %106, %107 : vector<1x128xf32>
    %109 = math.tanh %103 : vector<1x128xf32>
    %110 = vector.extract_strided_slice %108 {offsets = [0, 0], sizes = [1, 32], strides = [1, 1]} : vector<1x128xf32> to vector<1x32xf32>
    %111 = vector.extract_strided_slice %108 {offsets = [0, 32], sizes = [1, 32], strides = [1, 1]} : vector<1x128xf32> to vector<1x32xf32>
    %112 = vector.extract_strided_slice %109 {offsets = [0, 64], sizes = [1, 32], strides = [1, 1]} : vector<1x128xf32> to vector<1x32xf32>
    %113 = vector.extract_strided_slice %108 {offsets = [0, 96], sizes = [1, 32], strides = [1, 1]} : vector<1x128xf32> to vector<1x32xf32>
    %114 = arith.mulf %111, %98 : vector<1x32xf32>
    %115 = arith.mulf %110, %112 : vector<1x32xf32>
    %116 = arith.addf %114, %115 : vector<1x32xf32>
    %117 = math.tanh %116 : vector<1x32xf32>
    %118 = arith.mulf %113, %117 : vector<1x32xf32>
    %119 = vector.extract_strided_slice %7 {offsets = [6, 0], sizes = [1, 128], strides = [1, 1]} : vector<8x128xf32> to vector<1x128xf32>
    %cst_19 = arith.constant dense<0.000000e+00> : vector<1x128xf32>
    %120 = tpu.matmul %118, %8, %cst_19 {dimension_numbers = #tpu.dot_dimension_numbers<[1], [0], [0], [1], [0, 0, 1, 1], [], []>} : vector<1x32xf32>, vector<32x128xf32>, vector<1x128xf32> -> vector<1x128xf32>
    %121 = arith.addf %119, %120 : vector<1x128xf32>
    %122 = arith.negf %121 : vector<1x128xf32>
    %123 = math.exp %122 : vector<1x128xf32>
    %cst_20 = arith.constant 1.000000e+00 : f32
    %124 = vector.broadcast %cst_20 : f32 to vector<1x128xf32>
    %125 = arith.addf %124, %123 : vector<1x128xf32>
    %126 = arith.divf %124, %125 : vector<1x128xf32>
    %127 = math.tanh %121 : vector<1x128xf32>
    %128 = vector.extract_strided_slice %126 {offsets = [0, 0], sizes = [1, 32], strides = [1, 1]} : vector<1x128xf32> to vector<1x32xf32>
    %129 = vector.extract_strided_slice %126 {offsets = [0, 32], sizes = [1, 32], strides = [1, 1]} : vector<1x128xf32> to vector<1x32xf32>
    %130 = vector.extract_strided_slice %127 {offsets = [0, 64], sizes = [1, 32], strides = [1, 1]} : vector<1x128xf32> to vector<1x32xf32>
    %131 = vector.extract_strided_slice %126 {offsets = [0, 96], sizes = [1, 32], strides = [1, 1]} : vector<1x128xf32> to vector<1x32xf32>
    %132 = arith.mulf %129, %116 : vector<1x32xf32>
    %133 = arith.mulf %128, %130 : vector<1x32xf32>
    %134 = arith.addf %132, %133 : vector<1x32xf32>
    %135 = math.tanh %134 : vector<1x32xf32>
    %136 = arith.mulf %131, %135 : vector<1x32xf32>
    %137 = vector.extract_strided_slice %7 {offsets = [7, 0], sizes = [1, 128], strides = [1, 1]} : vector<8x128xf32> to vector<1x128xf32>
    %cst_21 = arith.constant dense<0.000000e+00> : vector<1x128xf32>
    %138 = tpu.matmul %136, %8, %cst_21 {dimension_numbers = #tpu.dot_dimension_numbers<[1], [0], [0], [1], [0, 0, 1, 1], [], []>} : vector<1x32xf32>, vector<32x128xf32>, vector<1x128xf32> -> vector<1x128xf32>
    %139 = arith.addf %137, %138 : vector<1x128xf32>
    %140 = arith.negf %139 : vector<1x128xf32>
    %141 = math.exp %140 : vector<1x128xf32>
    %cst_22 = arith.constant 1.000000e+00 : f32
    %142 = vector.broadcast %cst_22 : f32 to vector<1x128xf32>
    %143 = arith.addf %142, %141 : vector<1x128xf32>
    %144 = arith.divf %142, %143 : vector<1x128xf32>
    %145 = math.tanh %139 : vector<1x128xf32>
    %146 = vector.extract_strided_slice %144 {offsets = [0, 0], sizes = [1, 32], strides = [1, 1]} : vector<1x128xf32> to vector<1x32xf32>
    %147 = vector.extract_strided_slice %144 {offsets = [0, 32], sizes = [1, 32], strides = [1, 1]} : vector<1x128xf32> to vector<1x32xf32>
    %148 = vector.extract_strided_slice %145 {offsets = [0, 64], sizes = [1, 32], strides = [1, 1]} : vector<1x128xf32> to vector<1x32xf32>
    %149 = vector.extract_strided_slice %144 {offsets = [0, 96], sizes = [1, 32], strides = [1, 1]} : vector<1x128xf32> to vector<1x32xf32>
    %150 = arith.mulf %147, %134 : vector<1x32xf32>
    %151 = arith.mulf %146, %148 : vector<1x32xf32>
    %152 = arith.addf %150, %151 : vector<1x32xf32>
    %153 = math.tanh %152 : vector<1x32xf32>
    %154 = arith.mulf %149, %153 : vector<1x32xf32>
    %155 = tpu.concatenate %28, %46, %64, %82, %100, %118, %136, %154 in 0 : vector<1x32xf32>, vector<1x32xf32>, vector<1x32xf32>, vector<1x32xf32>, vector<1x32xf32>, vector<1x32xf32>, vector<1x32xf32>, vector<1x32xf32> -> vector<8x32xf32>
    %c0_23 = arith.constant 0 : index
    %c0_24 = arith.constant 0 : index
    %156 = vector.load %arg3[%c0_23, %c0_24] : memref<32x24xf32, #tpu.memory_space<vmem>>, vector<32x24xf32>
    %cst_25 = arith.constant dense<0.000000e+00> : vector<8x24xf32>
    %157 = tpu.matmul %155, %156, %cst_25 {dimension_numbers = #tpu.dot_dimension_numbers<[1], [0], [0], [1], [0, 0, 1, 1], [], []>} : vector<8x32xf32>, vector<32x24xf32>, vector<8x24xf32> -> vector<8x24xf32>
    %c0_26 = arith.constant 0 : index
    %c0_27 = arith.constant 0 : index
    %158 = vector.load %arg4[%c0_26, %c0_27] : memref<1x24xf32, #tpu.memory_space<vmem>>, vector<1x24xf32>
    %159 = vector.broadcast %158 : vector<1x24xf32> to vector<8x24xf32>
    %160 = arith.addf %157, %159 : vector<8x24xf32>
    %cst_28 = arith.constant dense<0xFF800000> : vector<8xf32>
    %161 = vector.multi_reduction <maximumf>, %160, %cst_28 [1] : vector<8x24xf32> to vector<8xf32>
    %162 = vector.shape_cast %161 : vector<8xf32> to vector<8x1xf32>
    %163 = vector.broadcast %162 : vector<8x1xf32> to vector<8x24xf32>
    %164 = arith.subf %160, %163 : vector<8x24xf32>
    %165 = math.exp %164 : vector<8x24xf32>
    %cst_29 = arith.constant dense<0.000000e+00> : vector<8xf32>
    %166 = vector.multi_reduction <add>, %165, %cst_29 [1] : vector<8x24xf32> to vector<8xf32>
    %167 = vector.shape_cast %166 : vector<8xf32> to vector<8x1xf32>
    %168 = math.log %167 : vector<8x1xf32>
    %169 = vector.broadcast %168 : vector<8x1xf32> to vector<8x24xf32>
    %170 = arith.subf %164, %169 : vector<8x24xf32>
    %c0_30 = arith.constant 0 : index
    %c0_31 = arith.constant 0 : index
    %171 = vector.load %arg5[%c0_30, %c0_31] : memref<8x24xf32, #tpu.memory_space<vmem>>, vector<8x24xf32>
    tpu.vector_store %arg5[%c0_30, %c0_31], %170 {strides = array<i32>} : memref<8x24xf32, #tpu.memory_space<vmem>>, vector<8x24xf32>,
    return
  }
}

</mosaic_0001>

<llo_original>
// kernel: chord_lstm_forward.1
$region0: #{chord_lstm_forward.1}
  #allocation0 [shape = 'u32[]', space=smem, size = 0x4, offset = 0x4, fixed_abs, tag = 'smem constant byte address 0x4 - core index']
  #allocation1 [shape = 'u32[144,128]{1,0:T(1,128)}', space=vmem, size = 0x12000, scoped, tag = 'internal scratch']
  %s0 = inlined_call_operand.vmem [shape: s32[8,1], index: 0, kind: input, shape index: {}]
  %s1 = inlined_call_operand.vmem [shape: f32[24,128], index: 1, kind: input, shape index: {}]
  %s2 = inlined_call_operand.vmem [shape: f32[32,128], index: 2, kind: input, shape index: {}]
  %s3 = inlined_call_operand.vmem [shape: f32[32,24], index: 3, kind: input, shape index: {}]
  %s4 = inlined_call_operand.vmem [shape: f32[1,24], index: 4, kind: input, shape index: {}]
  %s5 = inlined_call_operand.hbm [shape: f32[8,24], index: 5, kind: output, shape index: {}]
  %s6 = sld [smem:[#allocation0]]
  $region30: #{chord_lstm_forward.1} parent=0
    _
  %s8 = ssub.s32 1, %s6
  %s9 = scalar_select 0, %s8, %s6
  $region1: #{chord_lstm_forward.1} parent=0
    #allocation2 [shape = 'u8[4096]{0}', space=vmem, size = 0x1000, scoped, tag = 'output window, operand 0, single buffered']
    #allocation3 [shape = 's32[1]{0}', space=sflag, size = 0x4, scoped, tag = 'scoped memory for chord_lstm_forward.1']
    %10 = vsyncpa [#allocation3], 0
    // Predicated region
    $region2: #{chord_lstm_forward.1} parent=1 // pred_check
      _
    $region3: #{chord_lstm_forward.1} parent=1 // pred_check_branch
      %12 = sbr.rel (0) target = $region5
    $region4: #{chord_lstm_forward.1} parent=1 // pred_region
      _
    $region5: #{chord_lstm_forward.1} parent=1 // pred_fallthru
      _
    // Predicated region
    $region6: #{chord_lstm_forward.1} parent=1 // pred_check
      _
    $region7: #{chord_lstm_forward.1} parent=1 // pred_check_branch
      %14 = sbr.rel (0) target = $region9
    $region8: #{chord_lstm_forward.1} parent=1 // pred_region
      _
    $region9: #{chord_lstm_forward.1} parent=1 // pred_fallthru
      _
    // Predicated region
    $region10: #{chord_lstm_forward.1} parent=1 // pred_check
      _
    $region11: #{chord_lstm_forward.1} parent=1 // pred_check_branch
      %16 = sbr.rel (0) target = $region13
    $region12: #{chord_lstm_forward.1} parent=1 // pred_region
      _
    $region13: #{chord_lstm_forward.1} parent=1 // pred_fallthru
      _
    // Predicated region
    $region14: #{chord_lstm_forward.1} parent=1 // pred_check
      _
    $region15: #{chord_lstm_forward.1} parent=1 // pred_check_branch
      %18 = sbr.rel (0) target = $region17
    $region16: #{chord_lstm_forward.1} parent=1 // pred_region
      _
    $region17: #{chord_lstm_forward.1} parent=1 // pred_fallthru
      _
    // Predicated region
    $region18: #{chord_lstm_forward.1} parent=1 // pred_check
      _
    $region19: #{chord_lstm_forward.1} parent=1 // pred_check_branch
      %20 = sbr.rel (0) target = $region21
    $region20: #{chord_lstm_forward.1} parent=1 // pred_region
      _
    $region21: #{chord_lstm_forward.1} parent=1 // pred_fallthru
      _
    %v21 = vlaneseq
    %v22 = vand.u32 %v21, 127
    %v23 = vld [vmem:[%s0] sm:$0xff]
    %24 = vset.pattern.permute.xlu0 0
    %25 = vperm.xlu0 %24, %v23
    %v26 = vpop.permute.xlu0 %25
    %vm27 = vcmp.eq.s32.totalorder %v22, %v26
    %v28 = vsel %vm27, 1, 0
    %v29 = vcvt.s32.f32 %v28
    %v30 = vld [vmem:[%s1] sm:$0xff]
    %v31 = vld [vmem:[%s1 + $0x8] sm:$0xff]
    %v32 = vld [vmem:[%s1 + $0x10] sm:$0xff]
    %vm33 = vcmask 195584
    %v35 = vsel %vm33, %v29, 0
    %37 = vmatprep.subr.mxu0 0.0
    %38 = vmatpush1.msra.mxu0 %v30
    %39 = vmatprep.subr.mxu0 0.0
    %40 = vmatpush1.msra.mxu0 %v31
    %41 = vmatprep.subr.mxu0 0.0
    %42 = vmatpush1.msra.mxu0 %v32
    %43 = vmatprep.subr.mxu0 0.0
    %44 = vmatpush1.msra.mxu0 0.0
    %45 = vmatprep.subr.mxu0 0.0
    %46 = vmatpush1.msra.mxu0 0.0
    %47 = vmatprep.subr.mxu0 0.0
    %48 = vmatpush1.msra.mxu0 0.0
    %49 = vmatprep.subr.mxu0 0.0
    %50 = vmatpush1.msra.mxu0 0.0
    %51 = vmatprep.subr.mxu0 0.0
    %52 = vmatpush1.msra.mxu0 0.0
    %53 = vmatprep.subr.mxu0 0.0
    %54 = vmatpush1.msra.mxu0 0.0
    %55 = vmatprep.subr.mxu0 0.0
    %56 = vmatpush1.msra.mxu0 0.0
    %57 = vmatprep.subr.mxu0 0.0
    %58 = vmatpush1.msra.mxu0 0.0
    %59 = vmatprep.subr.mxu0 0.0
    %60 = vmatpush1.msra.mxu0 0.0
    %61 = vmatprep.subr.mxu0 0.0
    %62 = vmatpush1.msra.mxu0 0.0
    %63 = vmatprep.subr.mxu0 0.0
    %64 = vmatpush1.msra.mxu0 0.0
    %65 = vmatprep.subr.mxu0 0.0
    %66 = vmatpush1.msra.mxu0 0.0
    %67 = vmatprep.subr.mxu0 0.0
    %68 = vmatpush1.msra.mxu0 0.0
    %69 = vmatprep.subr.mxu0 0.0
    %70 = vmatpush1.msra.mxu0 0.0
    %71 = vmatprep.subr.mxu0 0.0
    %72 = vmatpush1.msra.mxu0 0.0
    %73 = vmatprep.subr.mxu0 0.0
    %74 = vmatpush1.msra.mxu0 0.0
    %75 = vmatprep.subr.mxu0 0.0
    %76 = vmatpush1.msra.mxu0 0.0
    %77 = vmatprep.subr.mxu0 0.0
    %78 = vmatpush1.msra.mxu0 0.0
    %79 = vmatprep.subr.mxu0 0.0
    %80 = vmatpush1.msra.mxu0 0.0
    %81 = vmatprep.subr.mxu0 0.0
    %82 = vmatpush1.msra.mxu0 0.0
    %83 = vmatprep.subr.mxu0 0.0
    %84 = vmatpush1.msra.mxu0 0.0
    %85 = vmatprep.subr.mxu0 0.0
    %86 = vmatpush1.msra.mxu0 0.0
    %87 = vmatprep.subr.mxu0 0.0
    %88 = vmatpush1.msra.mxu0 0.0
    %89 = vmatprep.subr.mxu0 0.0
    %90 = vmatpush1.msra.mxu0 0.0
    %91 = vmatprep.subr.mxu0 0.0
    %92 = vmatpush1.msra.mxu0 0.0
    %93 = vmatprep.subr.mxu0 0.0
    %94 = vmatpush1.msra.mxu0 0.0
    %95 = vmatprep.subr.mxu0 0.0
    %96 = vmatpush1.msra.mxu0 0.0
    %97 = vmatprep.subr.mxu0 0.0
    %98 = vmatpush1.msra.mxu0 0.0
    %99 = vmatprep.subr.mxu0 0.0
    %100 = vmatpush1.msra.mxu0 0.0
    %101 = vmatprep.mubr.f32.mxu0 0.0
    %102 = vmatmul.mubr.f32.gmra.mrb[0].mxu0 %v35
    %v103 = vpop.f32.mrb[0].mxu0
    %v104 = vadd.f32 0.0, %v103
    %v105 = vpop.f32.mrb[0].mxu0
    %106 = vdwg.mxu0
    %v107 = vld [vmem:[%s2] sm:$0xff]
    %v108 = vld [vmem:[%s2 + $0x8] sm:$0xff]
    %v109 = vld [vmem:[%s2 + $0x10] sm:$0xff]
    %v110 = vld [vmem:[%s2 + $0x18] sm:$0xff]
    %vm111 = vcmask 261120
    %v113 = vsel %vm111, 0.0, 0
    %115 = vmatprep.subr.mxu0 0.0
    %116 = vmatpush1.msra.mxu0 %v107
    %117 = vmatprep.subr.mxu0 0.0
    %118 = vmatpush1.msra.mxu0 %v108
    %119 = vmatprep.subr.mxu0 0.0
    %120 = vmatpush1.msra.mxu0 %v109
    %121 = vmatprep.subr.mxu0 0.0
    %122 = vmatpush1.msra.mxu0 %v110
    %123 = vmatprep.subr.mxu0 0.0
    %124 = vmatpush1.msra.mxu0 0.0
    %125 = vmatprep.subr.mxu0 0.0
    %126 = vmatpush1.msra.mxu0 0.0
    %127 = vmatprep.subr.mxu0 0.0
    %128 = vmatpush1.msra.mxu0 0.0
    %129 = vmatprep.subr.mxu0 0.0
    %130 = vmatpush1.msra.mxu0 0.0
    %131 = vmatprep.subr.mxu0 0.0
    %132 = vmatpush1.msra.mxu0 0.0
    %133 = vmatprep.subr.mxu0 0.0
    %134 = vmatpush1.msra.mxu0 0.0
    %135 = vmatprep.subr.mxu0 0.0
    %136 = vmatpush1.msra.mxu0 0.0
    %137 = vmatprep.subr.mxu0 0.0
    %138 = vmatpush1.msra.mxu0 0.0
    %139 = vmatprep.subr.mxu0 0.0
    %140 = vmatpush1.msra.mxu0 0.0
    %141 = vmatprep.subr.mxu0 0.0
    %142 = vmatpush1.msra.mxu0 0.0
    %143 = vmatprep.subr.mxu0 0.0
    %144 = vmatpush1.msra.mxu0 0.0
    %145 = vmatprep.subr.mxu0 0.0
    %146 = vmatpush1.msra.mxu0 0.0
    %147 = vmatprep.subr.mxu0 0.0
    %148 = vmatpush1.msra.mxu0 0.0
    %149 = vmatprep.subr.mxu0 0.0
    %150 = vmatpush1.msra.mxu0 0.0
    %151 = vmatprep.subr.mxu0 0.0
    %152 = vmatpush1.msra.mxu0 0.0
    %153 = vmatprep.subr.mxu0 0.0
    %154 = vmatpush1.msra.mxu0 0.0
    %155 = vmatprep.subr.mxu0 0.0
    %156 = vmatpush1.msra.mxu0 0.0
    %157 = vmatprep.subr.mxu0 0.0
    %158 = vmatpush1.msra.mxu0 0.0
    %159 = vmatprep.subr.mxu0 0.0
    %160 = vmatpush1.msra.mxu0 0.0
    %161 = vmatprep.subr.mxu0 0.0
    %162 = vmatpush1.msra.mxu0 0.0
    %163 = vmatprep.subr.mxu0 0.0
    %164 = vmatpush1.msra.mxu0 0.0
    %165 = vmatprep.subr.mxu0 0.0
    %166 = vmatpush1.msra.mxu0 0.0
    %167 = vmatprep.subr.mxu0 0.0
    %168 = vmatpush1.msra.mxu0 0.0
    %169 = vmatprep.subr.mxu0 0.0
    %170 = vmatpush1.msra.mxu0 0.0
    %171 = vmatprep.subr.mxu0 0.0
    %172 = vmatpush1.msra.mxu0 0.0
    %173 = vmatprep.subr.mxu0 0.0
    %174 = vmatpush1.msra.mxu0 0.0
    %175 = vmatprep.subr.mxu0 0.0
    %176 = vmatpush1.msra.mxu0 0.0
    %177 = vmatprep.subr.mxu0 0.0
    %178 = vmatpush1.msra.mxu0 0.0
    %179 = vmatprep.mubr.f32.mxu0 0.0
    %180 = vmatmul.mubr.f32.gmra.mrb[0].mxu0 %v113
    %v181 = vpop.f32.mrb[0].mxu0
    %v182 = vadd.f32 0.0, %v181
    %v183 = vpop.f32.mrb[0].mxu0
    %184 = vdwg.mxu0
    %v185 = vadd.f32 %v104, %v182
    %v186 = vxor.u32 %v185, 2147483648
    %v187 = vmul.f32 %v186, 1.442695
    %v188 = vpow.pop %v187
    %v189 = vadd.f32 %v188, 1.0
    %v190 = vrcp.pop %v189
    %v191 = vmul.f32 1.0, %v190
    %v192 = vtanh.pop %v185
    %v193 = vmul.f32 %v191, 0.0
    %195 = vrot.lane.b32.xlu0 %v192, 64
    %v196 = vpop.permute.xlu0 %195
    %v198 = vmul.f32 %v191, %v196
    %200 = vrot.lane.b32.xlu0 %v198, 32
    %v201 = vpop.permute.xlu0 %200
    %v203 = vadd.f32 %v193, %v201
    %v204 = vtanh.pop %v203
    %206 = vrot.lane.b32.xlu0 %v204, 64
    %v207 = vpop.permute.xlu0 %206
    %v209 = vmul.f32 %v191, %v207
    %211 = vrot.lane.b32.xlu0 %v209, 32
    %v212 = vpop.permute.xlu0 %211
    %v213 = vsel %vm111, %v212, 0
    %215 = vmatprep.subr.mxu0 0.0
    %216 = vmatpush1.msra.mxu0 %v107
    %217 = vmatprep.subr.mxu0 0.0
    %218 = vmatpush1.msra.mxu0 %v108
    %219 = vmatprep.subr.mxu0 0.0
    %220 = vmatpush1.msra.mxu0 %v109
    %221 = vmatprep.subr.mxu0 0.0
    %222 = vmatpush1.msra.mxu0 %v110
    %223 = vmatprep.subr.mxu0 0.0
    %224 = vmatpush1.msra.mxu0 0.0
    %225 = vmatprep.subr.mxu0 0.0
    %226 = vmatpush1.msra.mxu0 0.0
    %227 = vmatprep.subr.mxu0 0.0
    %228 = vmatpush1.msra.mxu0 0.0
    %229 = vmatprep.subr.mxu0 0.0
    %230 = vmatpush1.msra.mxu0 0.0
    %231 = vmatprep.subr.mxu0 0.0
    %232 = vmatpush1.msra.mxu0 0.0
    %233 = vmatprep.subr.mxu0 0.0
    %234 = vmatpush1.msra.mxu0 0.0
    %235 = vmatprep.subr.mxu0 0.0
    %236 = vmatpush1.msra.mxu0 0.0
    %237 = vmatprep.subr.mxu0 0.0
    %238 = vmatpush1.msra.mxu0 0.0
    %239 = vmatprep.subr.mxu0 0.0
    %240 = vmatpush1.msra.mxu0 0.0
    %241 = vmatprep.subr.mxu0 0.0
    %242 = vmatpush1.msra.mxu0 0.0
    %243 = vmatprep.subr.mxu0 0.0
    %244 = vmatpush1.msra.mxu0 0.0
    %245 = vmatprep.subr.mxu0 0.0
    %246 = vmatpush1.msra.mxu0 0.0
    %247 = vmatprep.subr.mxu0 0.0
    %248 = vmatpush1.msra.mxu0 0.0
    %249 = vmatprep.subr.mxu0 0.0
    %250 = vmatpush1.msra.mxu0 0.0
    %251 = vmatprep.subr.mxu0 0.0
    %252 = vmatpush1.msra.mxu0 0.0
    %253 = vmatprep.subr.mxu0 0.0
    %254 = vmatpush1.msra.mxu0 0.0
    %255 = vmatprep.subr.mxu0 0.0
    %256 = vmatpush1.msra.mxu0 0.0
    %257 = vmatprep.subr.mxu0 0.0
    %258 = vmatpush1.msra.mxu0 0.0
    %259 = vmatprep.subr.mxu0 0.0
    %260 = vmatpush1.msra.mxu0 0.0
    %261 = vmatprep.subr.mxu0 0.0
    %262 = vmatpush1.msra.mxu0 0.0
    %263 = vmatprep.subr.mxu0 0.0
    %264 = vmatpush1.msra.mxu0 0.0
    %265 = vmatprep.subr.mxu0 0.0
    %266 = vmatpush1.msra.mxu0 0.0
    %267 = vmatprep.subr.mxu0 0.0
    %268 = vmatpush1.msra.mxu0 0.0
    %269 = vmatprep.subr.mxu0 0.0
    %270 = vmatpush1.msra.mxu0 0.0
    %271 = vmatprep.subr.mxu0 0.0
    %272 = vmatpush1.msra.mxu0 0.0
    %273 = vmatprep.subr.mxu0 0.0
    %274 = vmatpush1.msra.mxu0 0.0
    %275 = vmatprep.subr.mxu0 0.0
    %276 = vmatpush1.msra.mxu0 0.0
    %277 = vmatprep.subr.mxu0 0.0
    %278 = vmatpush1.msra.mxu0 0.0
    %279 = vmatprep.mubr.f32.mxu0 0.0
    %280 = vmatmul.mubr.f32.gmra.mrb[0].mxu0 %v213
    %v281 = vpop.f32.mrb[0].mxu0
    %v282 = vadd.f32 0.0, %v281
    %v283 = vpop.f32.mrb[0].mxu0
    %284 = vdwg.mxu0
    %v286 = vrot.slane %v282, 7
    %v288 = vadd.f32 %v104, %v286
    %v289 = vxor.u32 %v288, 2147483648
    %v290 = vmul.f32 %v289, 1.442695
    %v291 = vpow.pop %v290
    %v292 = vadd.f32 %v291, 1.0
    %v293 = vrcp.pop %v292
    %v294 = vmul.f32 1.0, %v293
    %v295 = vtanh.pop %v288
    %v297 = vrot.slane %v203, 7
    %v299 = vmul.f32 %v294, %v297
    %301 = vrot.lane.b32.xlu0 %v295, 64
    %v302 = vpop.permute.xlu0 %301
    %v304 = vmul.f32 %v294, %v302
    %306 = vrot.lane.b32.xlu0 %v304, 32
    %v307 = vpop.permute.xlu0 %306
    %v309 = vadd.f32 %v299, %v307
    %v310 = vtanh.pop %v309
    %312 = vrot.lane.b32.xlu0 %v310, 64
    %v313 = vpop.permute.xlu0 %312
    %v315 = vmul.f32 %v294, %v313
    %v317 = vrot.slane %v315, 1
    %318 = vrot.lane.b32.xlu0 %v317, 32
    %v319 = vpop.permute.xlu0 %318
    %v320 = vsel %vm111, %v319, 0
    %322 = vmatprep.subr.mxu0 0.0
    %323 = vmatpush1.msra.mxu0 %v107
    %324 = vmatprep.subr.mxu0 0.0
    %325 = vmatpush1.msra.mxu0 %v108
    %326 = vmatprep.subr.mxu0 0.0
    %327 = vmatpush1.msra.mxu0 %v109
    %328 = vmatprep.subr.mxu0 0.0
    %329 = vmatpush1.msra.mxu0 %v110
    %330 = vmatprep.subr.mxu0 0.0
    %331 = vmatpush1.msra.mxu0 0.0
    %332 = vmatprep.subr.mxu0 0.0
    %333 = vmatpush1.msra.mxu0 0.0
    %334 = vmatprep.subr.mxu0 0.0
    %335 = vmatpush1.msra.mxu0 0.0
    %336 = vmatprep.subr.mxu0 0.0
    %337 = vmatpush1.msra.mxu0 0.0
    %338 = vmatprep.subr.mxu0 0.0
    %339 = vmatpush1.msra.mxu0 0.0
    %340 = vmatprep.subr.mxu0 0.0
    %341 = vmatpush1.msra.mxu0 0.0
    %342 = vmatprep.subr.mxu0 0.0
    %343 = vmatpush1.msra.mxu0 0.0
    %344 = vmatprep.subr.mxu0 0.0
    %345 = vmatpush1.msra.mxu0 0.0
    %346 = vmatprep.subr.mxu0 0.0
    %347 = vmatpush1.msra.mxu0 0.0
    %348 = vmatprep.subr.mxu0 0.0
    %349 = vmatpush1.msra.mxu0 0.0
    %350 = vmatprep.subr.mxu0 0.0
    %351 = vmatpush1.msra.mxu0 0.0
    %352 = vmatprep.subr.mxu0 0.0
    %353 = vmatpush1.msra.mxu0 0.0
    %354 = vmatprep.subr.mxu0 0.0
    %355 = vmatpush1.msra.mxu0 0.0
    %356 = vmatprep.subr.mxu0 0.0
    %357 = vmatpush1.msra.mxu0 0.0
    %358 = vmatprep.subr.mxu0 0.0
    %359 = vmatpush1.msra.mxu0 0.0
    %360 = vmatprep.subr.mxu0 0.0
    %361 = vmatpush1.msra.mxu0 0.0
    %362 = vmatprep.subr.mxu0 0.0
    %363 = vmatpush1.msra.mxu0 0.0
    %364 = vmatprep.subr.mxu0 0.0
    %365 = vmatpush1.msra.mxu0 0.0
    %366 = vmatprep.subr.mxu0 0.0
    %367 = vmatpush1.msra.mxu0 0.0
    %368 = vmatprep.subr.mxu0 0.0
    %369 = vmatpush1.msra.mxu0 0.0
    %370 = vmatprep.subr.mxu0 0.0
    %371 = vmatpush1.msra.mxu0 0.0
    %372 = vmatprep.subr.mxu0 0.0
    %373 = vmatpush1.msra.mxu0 0.0
    %374 = vmatprep.subr.mxu0 0.0
    %375 = vmatpush1.msra.mxu0 0.0
    %376 = vmatprep.subr.mxu0 0.0
    %377 = vmatpush1.msra.mxu0 0.0
    %378 = vmatprep.subr.mxu0 0.0
    %379 = vmatpush1.msra.mxu0 0.0
    %380 = vmatprep.subr.mxu0 0.0
    %381 = vmatpush1.msra.mxu0 0.0
    %382 = vmatprep.subr.mxu0 0.0
    %383 = vmatpush1.msra.mxu0 0.0
    %384 = vmatprep.subr.mxu0 0.0
    %385 = vmatpush1.msra.mxu0 0.0
    %386 = vmatprep.mubr.f32.mxu0 0.0
    %387 = vmatmul.mubr.f32.gmra.mrb[0].mxu0 %v320
    %v388 = vpop.f32.mrb[0].mxu0
    %v389 = vadd.f32 0.0, %v388
    %v390 = vpop.f32.mrb[0].mxu0
    %391 = vdwg.mxu0
    %v393 = vrot.slane %v389, 6
    %v395 = vadd.f32 %v104, %v393
    %v396 = vxor.u32 %v395, 2147483648
    %v397 = vmul.f32 %v396, 1.442695
    %v398 = vpow.pop %v397
    %v399 = vadd.f32 %v398, 1.0
    %v400 = vrcp.pop %v399
    %v401 = vmul.f32 1.0, %v400
    %v402 = vtanh.pop %v395
    %v404 = vrot.slane %v309, 7
    %v406 = vmul.f32 %v401, %v404
    %408 = vrot.lane.b32.xlu0 %v402, 64
    %v409 = vpop.permute.xlu0 %408
    %v411 = vmul.f32 %v401, %v409
    %413 = vrot.lane.b32.xlu0 %v411, 32
    %v414 = vpop.permute.xlu0 %413
    %v416 = vadd.f32 %v406, %v414
    %v417 = vtanh.pop %v416
    %419 = vrot.lane.b32.xlu0 %v417, 64
    %v420 = vpop.permute.xlu0 %419
    %v422 = vmul.f32 %v401, %v420
    %v424 = vrot.slane %v422, 2
    %425 = vrot.lane.b32.xlu0 %v424, 32
    %v426 = vpop.permute.xlu0 %425
    %v427 = vsel %vm111, %v426, 0
    %429 = vmatprep.subr.mxu0 0.0
    %430 = vmatpush1.msra.mxu0 %v107
    %431 = vmatprep.subr.mxu0 0.0
    %432 = vmatpush1.msra.mxu0 %v108
    %433 = vmatprep.subr.mxu0 0.0
    %434 = vmatpush1.msra.mxu0 %v109
    %435 = vmatprep.subr.mxu0 0.0
    %436 = vmatpush1.msra.mxu0 %v110
    %437 = vmatprep.subr.mxu0 0.0
    %438 = vmatpush1.msra.mxu0 0.0
    %439 = vmatprep.subr.mxu0 0.0
    %440 = vmatpush1.msra.mxu0 0.0
    %441 = vmatprep.subr.mxu0 0.0
    %442 = vmatpush1.msra.mxu0 0.0
    %443 = vmatprep.subr.mxu0 0.0
    %444 = vmatpush1.msra.mxu0 0.0
    %445 = vmatprep.subr.mxu0 0.0
    %446 = vmatpush1.msra.mxu0 0.0
    %447 = vmatprep.subr.mxu0 0.0
    %448 = vmatpush1.msra.mxu0 0.0
    %449 = vmatprep.subr.mxu0 0.0
    %450 = vmatpush1.msra.mxu0 0.0
    %451 = vmatprep.subr.mxu0 0.0
    %452 = vmatpush1.msra.mxu0 0.0
    %453 = vmatprep.subr.mxu0 0.0
    %454 = vmatpush1.msra.mxu0 0.0
    %455 = vmatprep.subr.mxu0 0.0
    %456 = vmatpush1.msra.mxu0 0.0
    %457 = vmatprep.subr.mxu0 0.0
    %458 = vmatpush1.msra.mxu0 0.0
    %459 = vmatprep.subr.mxu0 0.0
    %460 = vmatpush1.msra.mxu0 0.0
    %461 = vmatprep.subr.mxu0 0.0
    %462 = vmatpush1.msra.mxu0 0.0
    %463 = vmatprep.subr.mxu0 0.0
    %464 = vmatpush1.msra.mxu0 0.0
    %465 = vmatprep.subr.mxu0 0.0
    %466 = vmatpush1.msra.mxu0 0.0
    %467 = vmatprep.subr.mxu0 0.0
    %468 = vmatpush1.msra.mxu0 0.0
    %469 = vmatprep.subr.mxu0 0.0
    %470 = vmatpush1.msra.mxu0 0.0
    %471 = vmatprep.subr.mxu0 0.0
    %472 = vmatpush1.msra.mxu0 0.0
    %473 = vmatprep.subr.mxu0 0.0
    %474 = vmatpush1.msra.mxu0 0.0
    %475 = vmatprep.subr.mxu0 0.0
    %476 = vmatpush1.msra.mxu0 0.0
    %477 = vmatprep.subr.mxu0 0.0
    %478 = vmatpush1.msra.mxu0 0.0
    %479 = vmatprep.subr.mxu0 0.0
    %480 = vmatpush1.msra.mxu0 0.0
    %481 = vmatprep.subr.mxu0 0.0
    %482 = vmatpush1.msra.mxu0 0.0
    %483 = vmatprep.subr.mxu0 0.0
    %484 = vmatpush1.msra.mxu0 0.0
    %485 = vmatprep.subr.mxu0 0.0
    %486 = vmatpush1.msra.mxu0 0.0
    %487 = vmatprep.subr.mxu0 0.0
    %488 = vmatpush1.msra.mxu0 0.0
    %489 = vmatprep.subr.mxu0 0.0
    %490 = vmatpush1.msra.mxu0 0.0
    %491 = vmatprep.subr.mxu0 0.0
    %492 = vmatpush1.msra.mxu0 0.0
    %493 = vmatprep.mubr.f32.mxu0 0.0
    %494 = vmatmul.mubr.f32.gmra.mrb[0].mxu0 %v427
    %v495 = vpop.f32.mrb[0].mxu0
    %v496 = vadd.f32 0.0, %v495
    %v497 = vpop.f32.mrb[0].mxu0
    %498 = vdwg.mxu0
    %v500 = vrot.slane %v496, 5
    %v502 = vadd.f32 %v104, %v500
    %v503 = vxor.u32 %v502, 2147483648
    %v504 = vmul.f32 %v503, 1.442695
    %v505 = vpow.pop %v504
    %v506 = vadd.f32 %v505, 1.0
    %v507 = vrcp.pop %v506
    %v508 = vmul.f32 1.0, %v507
    %v509 = vtanh.pop %v502
    %v511 = vrot.slane %v416, 7
    %v513 = vmul.f32 %v508, %v511
    %515 = vrot.lane.b32.xlu0 %v509, 64
    %v516 = vpop.permute.xlu0 %515
    %v518 = vmul.f32 %v508, %v516
    %520 = vrot.lane.b32.xlu0 %v518, 32
    %v521 = vpop.permute.xlu0 %520
    %v523 = vadd.f32 %v513, %v521
    %v524 = vtanh.pop %v523
    %526 = vrot.lane.b32.xlu0 %v524, 64
    %v527 = vpop.permute.xlu0 %526
    %v529 = vmul.f32 %v508, %v527
    %v531 = vrot.slane %v529, 3
    %532 = vrot.lane.b32.xlu0 %v531, 32
    %v533 = vpop.permute.xlu0 %532
    %v534 = vsel %vm111, %v533, 0
    %536 = vmatprep.subr.mxu0 0.0
    %537 = vmatpush1.msra.mxu0 %v107
    %538 = vmatprep.subr.mxu0 0.0
    %539 = vmatpush1.msra.mxu0 %v108
    %540 = vmatprep.subr.mxu0 0.0
    %541 = vmatpush1.msra.mxu0 %v109
    %542 = vmatprep.subr.mxu0 0.0
    %543 = vmatpush1.msra.mxu0 %v110
    %544 = vmatprep.subr.mxu0 0.0
    %545 = vmatpush1.msra.mxu0 0.0
    %546 = vmatprep.subr.mxu0 0.0
    %547 = vmatpush1.msra.mxu0 0.0
    %548 = vmatprep.subr.mxu0 0.0
    %549 = vmatpush1.msra.mxu0 0.0
    %550 = vmatprep.subr.mxu0 0.0
    %551 = vmatpush1.msra.mxu0 0.0
    %552 = vmatprep.subr.mxu0 0.0
    %553 = vmatpush1.msra.mxu0 0.0
    %554 = vmatprep.subr.mxu0 0.0
    %555 = vmatpush1.msra.mxu0 0.0
    %556 = vmatprep.subr.mxu0 0.0
    %557 = vmatpush1.msra.mxu0 0.0
    %558 = vmatprep.subr.mxu0 0.0
    %559 = vmatpush1.msra.mxu0 0.0
    %560 = vmatprep.subr.mxu0 0.0
    %561 = vmatpush1.msra.mxu0 0.0
    %562 = vmatprep.subr.mxu0 0.0
    %563 = vmatpush1.msra.mxu0 0.0
    %564 = vmatprep.subr.mxu0 0.0
    %565 = vmatpush1.msra.mxu0 0.0
    %566 = vmatprep.subr.mxu0 0.0
    %567 = vmatpush1.msra.mxu0 0.0
    %568 = vmatprep.subr.mxu0 0.0
    %569 = vmatpush1.msra.mxu0 0.0
    %570 = vmatprep.subr.mxu0 0.0
    %571 = vmatpush1.msra.mxu0 0.0
    %572 = vmatprep.subr.mxu0 0.0
    %573 = vmatpush1.msra.mxu0 0.0
    %574 = vmatprep.subr.mxu0 0.0
    %575 = vmatpush1.msra.mxu0 0.0
    %576 = vmatprep.subr.mxu0 0.0
    %577 = vmatpush1.msra.mxu0 0.0
    %578 = vmatprep.subr.mxu0 0.0
    %579 = vmatpush1.msra.mxu0 0.0
    %580 = vmatprep.subr.mxu0 0.0
    %581 = vmatpush1.msra.mxu0 0.0
    %582 = vmatprep.subr.mxu0 0.0
    %583 = vmatpush1.msra.mxu0 0.0
    %584 = vmatprep.subr.mxu0 0.0
    %585 = vmatpush1.msra.mxu0 0.0
    %586 = vmatprep.subr.mxu0 0.0
    %587 = vmatpush1.msra.mxu0 0.0
    %588 = vmatprep.subr.mxu0 0.0
    %589 = vmatpush1.msra.mxu0 0.0
    %590 = vmatprep.subr.mxu0 0.0
    %591 = vmatpush1.msra.mxu0 0.0
    %592 = vmatprep.subr.mxu0 0.0
    %593 = vmatpush1.msra.mxu0 0.0
    %594 = vmatprep.subr.mxu0 0.0
    %595 = vmatpush1.msra.mxu0 0.0
    %596 = vmatprep.subr.mxu0 0.0
    %597 = vmatpush1.msra.mxu0 0.0
    %598 = vmatprep.subr.mxu0 0.0
    %599 = vmatpush1.msra.mxu0 0.0
    %600 = vmatprep.mubr.f32.mxu0 0.0
    %601 = vmatmul.mubr.f32.gmra.mrb[0].mxu0 %v534
    %v602 = vpop.f32.mrb[0].mxu0
    %v603 = vadd.f32 0.0, %v602
    %v604 = vpop.f32.mrb[0].mxu0
    %605 = vdwg.mxu0
    %v607 = vrot.slane %v603, 4
    %v609 = vadd.f32 %v104, %v607
    %v610 = vxor.u32 %v609, 2147483648
    %v611 = vmul.f32 %v610, 1.442695
    %v612 = vpow.pop %v611
    %v613 = vadd.f32 %v612, 1.0
    %v614 = vrcp.pop %v613
    %v615 = vmul.f32 1.0, %v614
    %v616 = vtanh.pop %v609
    %v618 = vrot.slane %v523, 7
    %v620 = vmul.f32 %v615, %v618
    %622 = vrot.lane.b32.xlu0 %v616, 64
    %v623 = vpop.permute.xlu0 %622
    %v625 = vmul.f32 %v615, %v623
    %627 = vrot.lane.b32.xlu0 %v625, 32
    %v628 = vpop.permute.xlu0 %627
    %v630 = vadd.f32 %v620, %v628
    %v631 = vtanh.pop %v630
    %633 = vrot.lane.b32.xlu0 %v631, 64
    %v634 = vpop.permute.xlu0 %633
    %v636 = vmul.f32 %v615, %v634
    %v638 = vrot.slane %v636, 4
    %639 = vrot.lane.b32.xlu0 %v638, 32
    %v640 = vpop.permute.xlu0 %639
    %v641 = vsel %vm111, %v640, 0
    %643 = vmatprep.subr.mxu0 0.0
    %644 = vmatpush1.msra.mxu0 %v107
    %645 = vmatprep.subr.mxu0 0.0
    %646 = vmatpush1.msra.mxu0 %v108
    %647 = vmatprep.subr.mxu0 0.0
    %648 = vmatpush1.msra.mxu0 %v109
    %649 = vmatprep.subr.mxu0 0.0
    %650 = vmatpush1.msra.mxu0 %v110
    %651 = vmatprep.subr.mxu0 0.0
    %652 = vmatpush1.msra.mxu0 0.0
    %653 = vmatprep.subr.mxu0 0.0
    %654 = vmatpush1.msra.mxu0 0.0
    %655 = vmatprep.subr.mxu0 0.0
    %656 = vmatpush1.msra.mxu0 0.0
    %657 = vmatprep.subr.mxu0 0.0
    %658 = vmatpush1.msra.mxu0 0.0
    %659 = vmatprep.subr.mxu0 0.0
    %660 = vmatpush1.msra.mxu0 0.0
    %661 = vmatprep.subr.mxu0 0.0
    %662 = vmatpush1.msra.mxu0 0.0
    %663 = vmatprep.subr.mxu0 0.0
    %664 = vmatpush1.msra.mxu0 0.0
    %665 = vmatprep.subr.mxu0 0.0
    %666 = vmatpush1.msra.mxu0 0.0
    %667 = vmatprep.subr.mxu0 0.0
    %668 = vmatpush1.msra.mxu0 0.0
    %669 = vmatprep.subr.mxu0 0.0
    %670 = vmatpush1.msra.mxu0 0.0
    %671 = vmatprep.subr.mxu0 0.0
    %672 = vmatpush1.msra.mxu0 0.0
    %673 = vmatprep.subr.mxu0 0.0
    %674 = vmatpush1.msra.mxu0 0.0
    %675 = vmatprep.subr.mxu0 0.0
    %676 = vmatpush1.msra.mxu0 0.0
    %677 = vmatprep.subr.mxu0 0.0
    %678 = vmatpush1.msra.mxu0 0.0
    %679 = vmatprep.subr.mxu0 0.0
    %680 = vmatpush1.msra.mxu0 0.0
    %681 = vmatprep.subr.mxu0 0.0
    %682 = vmatpush1.msra.mxu0 0.0
    %683 = vmatprep.subr.mxu0 0.0
    %684 = vmatpush1.msra.mxu0 0.0
    %685 = vmatprep.subr.mxu0 0.0
    %686 = vmatpush1.msra.mxu0 0.0
    %687 = vmatprep.subr.mxu0 0.0
    %688 = vmatpush1.msra.mxu0 0.0
    %689 = vmatprep.subr.mxu0 0.0
    %690 = vmatpush1.msra.mxu0 0.0
    %691 = vmatprep.subr.mxu0 0.0
    %692 = vmatpush1.msra.mxu0 0.0
    %693 = vmatprep.subr.mxu0 0.0
    %694 = vmatpush1.msra.mxu0 0.0
    %695 = vmatprep.subr.mxu0 0.0
    %696 = vmatpush1.msra.mxu0 0.0
    %697 = vmatprep.subr.mxu0 0.0
    %698 = vmatpush1.msra.mxu0 0.0
    %699 = vmatprep.subr.mxu0 0.0
    %700 = vmatpush1.msra.mxu0 0.0
    %701 = vmatprep.subr.mxu0 0.0
    %702 = vmatpush1.msra.mxu0 0.0
    %703 = vmatprep.subr.mxu0 0.0
    %704 = vmatpush1.msra.mxu0 0.0
    %705 = vmatprep.subr.mxu0 0.0
    %706 = vmatpush1.msra.mxu0 0.0
    %707 = vmatprep.mubr.f32.mxu0 0.0
    %708 = vmatmul.mubr.f32.gmra.mrb[0].mxu0 %v641
    %v709 = vpop.f32.mrb[0].mxu0
    %v710 = vadd.f32 0.0, %v709
    %v711 = vpop.f32.mrb[0].mxu0
    %712 = vdwg.mxu0
    %v714 = vrot.slane %v710, 3
    %v716 = vadd.f32 %v104, %v714
    %v717 = vxor.u32 %v716, 2147483648
    %v718 = vmul.f32 %v717, 1.442695
    %v719 = vpow.pop %v718
    %v720 = vadd.f32 %v719, 1.0
    %v721 = vrcp.pop %v720
    %v722 = vmul.f32 1.0, %v721
    %v723 = vtanh.pop %v716
    %v725 = vrot.slane %v630, 7
    %v727 = vmul.f32 %v722, %v725
    %729 = vrot.lane.b32.xlu0 %v723, 64
    %v730 = vpop.permute.xlu0 %729
    %v732 = vmul.f32 %v722, %v730
    %734 = vrot.lane.b32.xlu0 %v732, 32
    %v735 = vpop.permute.xlu0 %734
    %v737 = vadd.f32 %v727, %v735
    %v738 = vtanh.pop %v737
    %740 = vrot.lane.b32.xlu0 %v738, 64
    %v741 = vpop.permute.xlu0 %740
    %v743 = vmul.f32 %v722, %v741
    %v745 = vrot.slane %v743, 5
    %746 = vrot.lane.b32.xlu0 %v745, 32
    %v747 = vpop.permute.xlu0 %746
    %v748 = vsel %vm111, %v747, 0
    %750 = vmatprep.subr.mxu0 0.0
    %751 = vmatpush1.msra.mxu0 %v107
    %752 = vmatprep.subr.mxu0 0.0
    %753 = vmatpush1.msra.mxu0 %v108
    %754 = vmatprep.subr.mxu0 0.0
    %755 = vmatpush1.msra.mxu0 %v109
    %756 = vmatprep.subr.mxu0 0.0
    %757 = vmatpush1.msra.mxu0 %v110
    %758 = vmatprep.subr.mxu0 0.0
    %759 = vmatpush1.msra.mxu0 0.0
    %760 = vmatprep.subr.mxu0 0.0
    %761 = vmatpush1.msra.mxu0 0.0
    %762 = vmatprep.subr.mxu0 0.0
    %763 = vmatpush1.msra.mxu0 0.0
    %764 = vmatprep.subr.mxu0 0.0
    %765 = vmatpush1.msra.mxu0 0.0
    %766 = vmatprep.subr.mxu0 0.0
    %767 = vmatpush1.msra.mxu0 0.0
    %768 = vmatprep.subr.mxu0 0.0
    %769 = vmatpush1.msra.mxu0 0.0
    %770 = vmatprep.subr.mxu0 0.0
    %771 = vmatpush1.msra.mxu0 0.0
    %772 = vmatprep.subr.mxu0 0.0
    %773 = vmatpush1.msra.mxu0 0.0
    %774 = vmatprep.subr.mxu0 0.0
    %775 = vmatpush1.msra.mxu0 0.0
    %776 = vmatprep.subr.mxu0 0.0
    %777 = vmatpush1.msra.mxu0 0.0
    %778 = vmatprep.subr.mxu0 0.0
    %779 = vmatpush1.msra.mxu0 0.0
    %780 = vmatprep.subr.mxu0 0.0
    %781 = vmatpush1.msra.mxu0 0.0
    %782 = vmatprep.subr.mxu0 0.0
    %783 = vmatpush1.msra.mxu0 0.0
    %784 = vmatprep.subr.mxu0 0.0
    %785 = vmatpush1.msra.mxu0 0.0
    %786 = vmatprep.subr.mxu0 0.0
    %787 = vmatpush1.msra.mxu0 0.0
    %788 = vmatprep.subr.mxu0 0.0
    %789 = vmatpush1.msra.mxu0 0.0
    %790 = vmatprep.subr.mxu0 0.0
    %791 = vmatpush1.msra.mxu0 0.0
    %792 = vmatprep.subr.mxu0 0.0
    %793 = vmatpush1.msra.mxu0 0.0
    %794 = vmatprep.subr.mxu0 0.0
    %795 = vmatpush1.msra.mxu0 0.0
    %796 = vmatprep.subr.mxu0 0.0
    %797 = vmatpush1.msra.mxu0 0.0
    %798 = vmatprep.subr.mxu0 0.0
    %799 = vmatpush1.msra.mxu0 0.0
    %800 = vmatprep.subr.mxu0 0.0
    %801 = vmatpush1.msra.mxu0 0.0
    %802 = vmatprep.subr.mxu0 0.0
    %803 = vmatpush1.msra.mxu0 0.0
    %804 = vmatprep.subr.mxu0 0.0
    %805 = vmatpush1.msra.mxu0 0.0
    %806 = vmatprep.subr.mxu0 0.0
    %807 = vmatpush1.msra.mxu0 0.0
    %808 = vmatprep.subr.mxu0 0.0
    %809 = vmatpush1.msra.mxu0 0.0
    %810 = vmatprep.subr.mxu0 0.0
    %811 = vmatpush1.msra.mxu0 0.0
    %812 = vmatprep.subr.mxu0 0.0
    %813 = vmatpush1.msra.mxu0 0.0
    %814 = vmatprep.mubr.f32.mxu0 0.0
    %815 = vmatmul.mubr.f32.gmra.mrb[0].mxu0 %v748
    %v816 = vpop.f32.mrb[0].mxu0
    %v817 = vadd.f32 0.0, %v816
    %v818 = vpop.f32.mrb[0].mxu0
    %819 = vdwg.mxu0
    %v821 = vrot.slane %v817, 2
    %v823 = vadd.f32 %v104, %v821
    %v824 = vxor.u32 %v823, 2147483648
    %v825 = vmul.f32 %v824, 1.442695
    %v826 = vpow.pop %v825
    %v827 = vadd.f32 %v826, 1.0
    %v828 = vrcp.pop %v827
    %v829 = vmul.f32 1.0, %v828
    %v830 = vtanh.pop %v823
    %v832 = vrot.slane %v737, 7
    %v834 = vmul.f32 %v829, %v832
    %836 = vrot.lane.b32.xlu0 %v830, 64
    %v837 = vpop.permute.xlu0 %836
    %v839 = vmul.f32 %v829, %v837
    %841 = vrot.lane.b32.xlu0 %v839, 32
    %v842 = vpop.permute.xlu0 %841
    %v844 = vadd.f32 %v834, %v842
    %v845 = vtanh.pop %v844
    %847 = vrot.lane.b32.xlu0 %v845, 64
    %v848 = vpop.permute.xlu0 %847
    %v850 = vmul.f32 %v829, %v848
    %v852 = vrot.slane %v850, 6
    %853 = vrot.lane.b32.xlu0 %v852, 32
    %v854 = vpop.permute.xlu0 %853
    %v855 = vsel %vm111, %v854, 0
    %857 = vmatprep.subr.mxu0 0.0
    %858 = vmatpush1.msra.mxu0 %v107
    %859 = vmatprep.subr.mxu0 0.0
    %860 = vmatpush1.msra.mxu0 %v108
    %861 = vmatprep.subr.mxu0 0.0
    %862 = vmatpush1.msra.mxu0 %v109
    %863 = vmatprep.subr.mxu0 0.0
    %864 = vmatpush1.msra.mxu0 %v110
    %865 = vmatprep.subr.mxu0 0.0
    %866 = vmatpush1.msra.mxu0 0.0
    %867 = vmatprep.subr.mxu0 0.0
    %868 = vmatpush1.msra.mxu0 0.0
    %869 = vmatprep.subr.mxu0 0.0
    %870 = vmatpush1.msra.mxu0 0.0
    %871 = vmatprep.subr.mxu0 0.0
    %872 = vmatpush1.msra.mxu0 0.0
    %873 = vmatprep.subr.mxu0 0.0
    %874 = vmatpush1.msra.mxu0 0.0
    %875 = vmatprep.subr.mxu0 0.0
    %876 = vmatpush1.msra.mxu0 0.0
    %877 = vmatprep.subr.mxu0 0.0
    %878 = vmatpush1.msra.mxu0 0.0
    %879 = vmatprep.subr.mxu0 0.0
    %880 = vmatpush1.msra.mxu0 0.0
    %881 = vmatprep.subr.mxu0 0.0
    %882 = vmatpush1.msra.mxu0 0.0
    %883 = vmatprep.subr.mxu0 0.0
    %884 = vmatpush1.msra.mxu0 0.0
    %885 = vmatprep.subr.mxu0 0.0
    %886 = vmatpush1.msra.mxu0 0.0
    %887 = vmatprep.subr.mxu0 0.0
    %888 = vmatpush1.msra.mxu0 0.0
    %889 = vmatprep.subr.mxu0 0.0
    %890 = vmatpush1.msra.mxu0 0.0
    %891 = vmatprep.subr.mxu0 0.0
    %892 = vmatpush1.msra.mxu0 0.0
    %893 = vmatprep.subr.mxu0 0.0
    %894 = vmatpush1.msra.mxu0 0.0
    %895 = vmatprep.subr.mxu0 0.0
    %896 = vmatpush1.msra.mxu0 0.0
    %897 = vmatprep.subr.mxu0 0.0
    %898 = vmatpush1.msra.mxu0 0.0
    %899 = vmatprep.subr.mxu0 0.0
    %900 = vmatpush1.msra.mxu0 0.0
    %901 = vmatprep.subr.mxu0 0.0
    %902 = vmatpush1.msra.mxu0 0.0
    %903 = vmatprep.subr.mxu0 0.0
    %904 = vmatpush1.msra.mxu0 0.0
    %905 = vmatprep.subr.mxu0 0.0
    %906 = vmatpush1.msra.mxu0 0.0
    %907 = vmatprep.subr.mxu0 0.0
    %908 = vmatpush1.msra.mxu0 0.0
    %909 = vmatprep.subr.mxu0 0.0
    %910 = vmatpush1.msra.mxu0 0.0
    %911 = vmatprep.subr.mxu0 0.0
    %912 = vmatpush1.msra.mxu0 0.0
    %913 = vmatprep.subr.mxu0 0.0
    %914 = vmatpush1.msra.mxu0 0.0
    %915 = vmatprep.subr.mxu0 0.0
    %916 = vmatpush1.msra.mxu0 0.0
    %917 = vmatprep.subr.mxu0 0.0
    %918 = vmatpush1.msra.mxu0 0.0
    %919 = vmatprep.subr.mxu0 0.0
    %920 = vmatpush1.msra.mxu0 0.0
    %921 = vmatprep.mubr.f32.mxu0 0.0
    %922 = vmatmul.mubr.f32.gmra.mrb[0].mxu0 %v855
    %v923 = vpop.f32.mrb[0].mxu0
    %v924 = vadd.f32 0.0, %v923
    %v925 = vpop.f32.mrb[0].mxu0
    %926 = vdwg.mxu0
    %v928 = vrot.slane %v924, 1
    %v930 = vadd.f32 %v104, %v928
    %v931 = vxor.u32 %v930, 2147483648
    %v932 = vmul.f32 %v931, 1.442695
    %v933 = vpow.pop %v932
    %v934 = vadd.f32 %v933, 1.0
    %v935 = vrcp.pop %v934
    %v936 = vmul.f32 1.0, %v935
    %v937 = vtanh.pop %v930
    %v939 = vrot.slane %v844, 7
    %v941 = vmul.f32 %v936, %v939
    %943 = vrot.lane.b32.xlu0 %v937, 64
    %v944 = vpop.permute.xlu0 %943
    %v946 = vmul.f32 %v936, %v944
    %948 = vrot.lane.b32.xlu0 %v946, 32
    %v949 = vpop.permute.xlu0 %948
    %v951 = vadd.f32 %v941, %v949
    %v952 = vtanh.pop %v951
    %954 = vrot.lane.b32.xlu0 %v952, 64
    %v955 = vpop.permute.xlu0 %954
    %v957 = vmul.f32 %v936, %v955
    %vm958 = vcmask 1040384
    %v959 = vsel %vm958, %v209, %v315
    %vm960 = vcmask 1041408
    %v961 = vsel %vm960, %v959, %v422
    %vm962 = vcmask 1042432
    %v963 = vsel %vm962, %v961, %v529
    %vm964 = vcmask 1043456
    %v965 = vsel %vm964, %v963, %v636
    %vm966 = vcmask 1044480
    %v967 = vsel %vm966, %v965, %v743
    %vm968 = vcmask 1045504
    %v969 = vsel %vm968, %v967, %v850
    %vm970 = vcmask 1046528
    %v971 = vsel %vm970, %v969, %v957
    %v972 = vld [vmem:[%s3] sm:$0xff]
    %v973 = vld [vmem:[%s3 + $0x8] sm:$0xff]
    %v974 = vld [vmem:[%s3 + $0x10] sm:$0xff]
    %v975 = vld [vmem:[%s3 + $0x18] sm:$0xff]
    %v976 = vld [vmem:[%s4] sm:$0x1]
    %v978 = vlaneseq
    %v979 = vshrl.u32 %v978, 7
    %v980 = vsub.s32 0, %v979
    %v981 = vrot.slane %v976, %v980
    %984 = vrot.lane.b32.xlu0 %v971, 32
    %v985 = vpop.permute.xlu0 %984
    %v986 = vsel %vm111, %v985, 0
    %988 = vmatprep.subr.mxu0 0.0
    %989 = vmatpush1.msra.mxu0 %v972
    %990 = vmatprep.subr.mxu0 0.0
    %991 = vmatpush1.msra.mxu0 %v973
    %992 = vmatprep.subr.mxu0 0.0
    %993 = vmatpush1.msra.mxu0 %v974
    %994 = vmatprep.subr.mxu0 0.0
    %995 = vmatpush1.msra.mxu0 %v975
    %996 = vmatprep.subr.mxu0 0.0
    %997 = vmatpush1.msra.mxu0 0.0
    %998 = vmatprep.subr.mxu0 0.0
    %999 = vmatpush1.msra.mxu0 0.0
    %1000 = vmatprep.subr.mxu0 0.0
    %1001 = vmatpush1.msra.mxu0 0.0
    %1002 = vmatprep.subr.mxu0 0.0
    %1003 = vmatpush1.msra.mxu0 0.0
    %1004 = vmatprep.subr.mxu0 0.0
    %1005 = vmatpush1.msra.mxu0 0.0
    %1006 = vmatprep.subr.mxu0 0.0
    %1007 = vmatpush1.msra.mxu0 0.0
    %1008 = vmatprep.subr.mxu0 0.0
    %1009 = vmatpush1.msra.mxu0 0.0
    %1010 = vmatprep.subr.mxu0 0.0
    %1011 = vmatpush1.msra.mxu0 0.0
    %1012 = vmatprep.subr.mxu0 0.0
    %1013 = vmatpush1.msra.mxu0 0.0
    %1014 = vmatprep.subr.mxu0 0.0
    %1015 = vmatpush1.msra.mxu0 0.0
    %1016 = vmatprep.subr.mxu0 0.0
    %1017 = vmatpush1.msra.mxu0 0.0
    %1018 = vmatprep.subr.mxu0 0.0
    %1019 = vmatpush1.msra.mxu0 0.0
    %1020 = vmatprep.subr.mxu0 0.0
    %1021 = vmatpush1.msra.mxu0 0.0
    %1022 = vmatprep.subr.mxu0 0.0
    %1023 = vmatpush1.msra.mxu0 0.0
    %1024 = vmatprep.subr.mxu0 0.0
    %1025 = vmatpush1.msra.mxu0 0.0
    %1026 = vmatprep.subr.mxu0 0.0
    %1027 = vmatpush1.msra.mxu0 0.0
    %1028 = vmatprep.subr.mxu0 0.0
    %1029 = vmatpush1.msra.mxu0 0.0
    %1030 = vmatprep.subr.mxu0 0.0
    %1031 = vmatpush1.msra.mxu0 0.0
    %1032 = vmatprep.subr.mxu0 0.0
    %1033 = vmatpush1.msra.mxu0 0.0
    %1034 = vmatprep.subr.mxu0 0.0
    %1035 = vmatpush1.msra.mxu0 0.0
    %1036 = vmatprep.subr.mxu0 0.0
    %1037 = vmatpush1.msra.mxu0 0.0
    %1038 = vmatprep.subr.mxu0 0.0
    %1039 = vmatpush1.msra.mxu0 0.0
    %1040 = vmatprep.subr.mxu0 0.0
    %1041 = vmatpush1.msra.mxu0 0.0
    %1042 = vmatprep.subr.mxu0 0.0
    %1043 = vmatpush1.msra.mxu0 0.0
    %1044 = vmatprep.subr.mxu0 0.0
    %1045 = vmatpush1.msra.mxu0 0.0
    %1046 = vmatprep.subr.mxu0 0.0
    %1047 = vmatpush1.msra.mxu0 0.0
    %1048 = vmatprep.subr.mxu0 0.0
    %1049 = vmatpush1.msra.mxu0 0.0
    %1050 = vmatprep.subr.mxu0 0.0
    %1051 = vmatpush1.msra.mxu0 0.0
    %1052 = vmatprep.mubr.f32.mxu0 0.0
    %1053 = vmatmul.mubr.f32.gmra.mrb[0].mxu0 %v986
    %v1054 = vpop.f32.mrb[0].mxu0
    %v1055 = vadd.f32 %v981, %v1054
    %v1056 = vpop.f32.mrb[0].mxu0
    %1057 = vdwg.mxu0
    %v1058 = vsel %vm33, %v1055, -inf
    %1059 = vmax.xlane.f32.xlu0 %v1058
    %v1060 = vpop.xlane.xlu0 %1059
    %v1061 = vsub.f32 %v1055, %v1060
    %v1062 = vmul.f32 %v1061, 1.442695
    %v1063 = vpow.pop %v1062
    %v1064 = vsel %vm33, %v1063, 0.0
    %1065 = vadd.xlane.f32.xlu0 %v1064
    %v1066 = vpop.xlane.xlu0 %1065
    %v1067 = vlog2.pop %v1066
    %v1068 = vmul.f32 %v1067, 0.6931472
    %v1069 = vsub.f32 %v1061, %v1068
    %1070 = vst.msk [vmem:[#allocation2] sm:$0xff] %vm33, %v1069
    // Predicated region
    $region22: #{chord_lstm_forward.1} parent=1 // pred_check
      _
    $region23: #{chord_lstm_forward.1} parent=1 // pred_check_branch
      %1072 = sbr.rel (0) target = $region25
    $region24: #{chord_lstm_forward.1} parent=1 // pred_region
      %s1074 = ssub.s32 128, 128
      %1075 = vsyncadd [#allocation3], %s1074
      %s1077 = sshll.u32 [#allocation2], 4
      %s1078 = int_to_ptr.vmem [resolvable:$true] %s1077
      %1080 = dma.vmem_to_hbm [thread:$0]  %s1078, 128, %s5, [#allocation3]
    $region25: #{chord_lstm_forward.1} parent=1 // pred_fallthru
      _
    // Predicated region
    $region26: #{chord_lstm_forward.1} parent=1 // pred_check
      _
    $region27: #{chord_lstm_forward.1} parent=1 // pred_check_branch
      %1082 = sbr.rel (0) target = $region29
    $region28: #{chord_lstm_forward.1} parent=1 // pred_region
      %1083 = dma.done [#allocation3], 128
    $region29: #{chord_lstm_forward.1} parent=1 // pred_fallthru
      _
    %1084 = vsyncpa [#allocation3], 1

</llo_original>
